<compile_context>
chip_gen: v6e
topology: v6e:2x2x1
jax: 0.10.0
libtpu: 0.0.40
codegen_flags: <defaults>
</compile_context>

<pallas_src>
import functools

import jax
import jax.numpy as jnp
from jax.experimental import pallas as pl
from jax.experimental.pallas import tpu as pltpu

MAX_BLOCK_B = 1024       # rows per grid step ceiling (amortize ~0.35us/step on v5e/v6e)
SPLIT_THRESHOLD_B = 256  # once B >= this, force >= 2 grid steps so both v7x TCs get work


def _round_up(n, m):
    return ((n + m - 1) // m) * m


def _cdiv(a, b):
    return (a + b - 1) // b


def _choose_batch_tiling(B):
    """Pick (bt, B_pad, n_steps): balanced tiles that minimize batch padding, keep
    tiles <= MAX_BLOCK_B, and give >= 2 steps when B is large enough to split."""
    B8 = _round_up(max(B, 1), 8)
    n_steps = _cdiv(B8, MAX_BLOCK_B)
    if n_steps < 2 and B8 >= SPLIT_THRESHOLD_B:
        n_steps = 2
    bt = _round_up(_cdiv(B8, n_steps), 8)
    return bt, bt * n_steps, n_steps


def mlp_kernel(x_ref, w1_ref, w2_ref, w3_ref, bias_ref, o_ref, *, d1, d2, d3):
    """relu(x@W1+b1) -> relu(.@W2+b2) -> .@W3+b3. Weights arrive bf16, biases f32."""
    # x arrives f32 from the caller; single cast to bf16 for the MXU fast path.
    x = x_ref[...].astype(jnp.bfloat16)

    h1 = jnp.dot(x, w1_ref[...], preferred_element_type=jnp.float32)
    h1 = jnp.maximum(h1 + bias_ref[0:1, :d1], 0.0)

    h2 = jnp.dot(h1.astype(jnp.bfloat16), w2_ref[...],
                 preferred_element_type=jnp.float32)
    h2 = jnp.maximum(h2 + bias_ref[1:2, :d2], 0.0)

    h3 = jnp.dot(h2.astype(jnp.bfloat16), w3_ref[...],
                 preferred_element_type=jnp.float32)
    # Narrow (bt, 2) f32 store: masked vst (store slot has huge slack), tiny HBM write.
    o_ref[...] = (h3 + bias_ref[2:3, :d3]).astype(o_ref.dtype)


@jax.jit
def net_forward(x, w1_bf, w2_bf, w3_bf, bias_pack):
    B, length = x.shape
    d1 = w1_bf.shape[1]   # length >> 3
    d2 = w2_bf.shape[1]   # length >> 5
    d3 = w3_bf.shape[1]   # 2
    bw = bias_pack.shape[1]

    bt, B_pad, n_steps = _choose_batch_tiling(B)
    if B_pad != B:
        x = jnp.pad(x, ((0, B_pad - B), (0, 0)))

    kernel = functools.partial(mlp_kernel, d1=d1, d2=d2, d3=d3)

    out = pl.pallas_call(
        kernel,
        out_shape=jax.ShapeDtypeStruct((B_pad, d3), jnp.float32),
        grid_spec=pltpu.PrefetchScalarGridSpec(
            num_scalar_prefetch=0,
            grid=(n_steps,),
            in_specs=[
                pl.BlockSpec((bt, length), lambda i: (i, 0)),   # x: tiled over batch
                pl.BlockSpec((length, d1), lambda i: (0, 0)),   # W1 bf16: resident
                pl.BlockSpec((d1, d2),     lambda i: (0, 0)),   # W2 bf16: resident
                pl.BlockSpec((d2, d3),     lambda i: (0, 0)),   # W3 bf16: resident
                pl.BlockSpec((3, bw),      lambda i: (0, 0)),   # packed f32 biases
            ],
            out_specs=pl.BlockSpec((bt, d3), lambda i: (i, 0)), # narrow f32 output
        ),
        compiler_params=pltpu.CompilerParams(
            # Batch axis is independent -> shard grid steps across v7x's two TCs.
            dimension_semantics=("parallel",),
            # TODO(synk): if `length` scales so W1 becomes multi-MiB, set
            # vmem_limit_bytes, single-buffer the grid-invariant weight specs
            # (pipeline_mode=pl.Buffered(1)), and/or K-tile W1 with an accumulator
            # (v7x scoped VMEM default is 32 MiB of 64 MiB physical).
        ),
    )(x, w1_bf, w2_bf, w3_bf, bias_pack)

    return out[:B] if B_pad != B else out


def prepare_params(w1, b1, w2, b2, w3, b3):
    """One-time param prep, hoisted out of the per-call path:
    - cast weights to bf16 (halves weight DMA + resident VMEM, no per-step casts)
    - pack the three biases into a single f32 (3, bw) block -> one bias DMA.
    Weights are expected in (in, out) layout, i.e. PyTorch nn.Linear weight.T."""
    d1, d2, d3 = w1.shape[1], w2.shape[1], w3.shape[1]
    bw = max(d1, d2, d3)
    bias_pack = jnp.zeros((3, bw), jnp.float32)
    bias_pack = bias_pack.at[0, :d1].set(jnp.asarray(b1, jnp.float32).reshape(-1))
    bias_pack = bias_pack.at[1, :d2].set(jnp.asarray(b2, jnp.float32).reshape(-1))
    bias_pack = bias_pack.at[2, :d3].set(jnp.asarray(b3, jnp.float32).reshape(-1))
    return (jnp.asarray(w1, jnp.bfloat16),
            jnp.asarray(w2, jnp.bfloat16),
            jnp.asarray(w3, jnp.bfloat16),
            bias_pack)


def init_params(key, length):
    """Deterministic init mimicking nn.Linear's U(-1/sqrt(fan_in), 1/sqrt(fan_in))."""
    length1 = length >> 3
    length2 = length >> 5
    dims = [(length, length1), (length1, length2), (length2, 2)]
    params = []
    for (fan_in, fan_out) in dims:
        key, kw, kb = jax.random.split(key, 3)
        bound = 1.0 / jnp.sqrt(fan_in)
        # Stored directly as (in, out) == transposed PyTorch layout.
        w = jax.random.uniform(kw, (fan_in, fan_out), jnp.float32, -bound, bound)
        b = jax.random.uniform(kb, (1, fan_out), jnp.float32, -bound, bound)
        params.extend([w, b])
    return params


if __name__ == "__main__":
    length = 256          # -> fc1: 256->32, fc2: 32->8, fc3: 8->2
    batch = 8

    key = jax.random.PRNGKey(0)
    key, kx = jax.random.split(key)
    x = jax.random.normal(kx, (batch, length), jnp.float32)

    w1, b1, w2, b2, w3, b3 = init_params(key, length)
    w1_bf, w2_bf, w3_bf, bias_pack = prepare_params(w1, b1, w2, b2, w3, b3)

    def ref_fwd(xv):
        # Reference mirrors the kernel numerics: bf16 matmul inputs, f32 accumulate,
        # f32 bias add.
        bf = jnp.bfloat16
        h = jnp.maximum(jnp.dot(xv.astype(bf), w1_bf,
                                preferred_element_type=jnp.float32) + b1, 0.0)
        h = jnp.maximum(jnp.dot(h.astype(bf), w2_bf,
                                preferred_element_type=jnp.float32) + b2, 0.0)
        return jnp.dot(h.astype(bf), w3_bf,
                       preferred_element_type=jnp.float32) + b3

    out = net_forward(x, w1_bf, w2_bf, w3_bf, bias_pack)
    jax.block_until_ready(out)
    assert out.shape == (batch, 2)
    assert jnp.allclose(out, ref_fwd(x), atol=1e-3, rtol=1e-3)

    # Exercise the multi-step path: B=300 -> 2 balanced steps of 152 rows
    # (pads 300 -> 304 instead of 512), resident bf16 weights, narrow f32 output.
    key, kx2 = jax.random.split(key)
    x_big = jax.random.normal(kx2, (300, length), jnp.float32)
    out_big = net_forward(x_big, w1_bf, w2_bf, w3_bf, bias_pack)
    jax.block_until_ready(out_big)
    assert out_big.shape == (300, 2)
    assert jnp.allclose(out_big, ref_fwd(x_big), atol=1e-3, rtol=1e-3)

    print("KERNEL_OK")
</pallas_src>

<mosaic_0001>
module attributes {stable_mosaic.version = 11 : i64} {
  func.func @mlp_kernel(%arg0: i32, %arg1: memref<8x256xf32, #tpu.memory_space<vmem>>, %arg2: memref<256x32xbf16, #tpu.memory_space<vmem>>, %arg3: memref<32x8xbf16, #tpu.memory_space<vmem>>, %arg4: memref<8x2xbf16, #tpu.memory_space<vmem>>, %arg5: memref<3x32xf32, #tpu.memory_space<vmem>>, %arg6: memref<8x2xf32, #tpu.memory_space<vmem>>) attributes {dimension_semantics = [#tpu.dimension_semantics<parallel>], iteration_bounds = array<i64: 1>, scalar_prefetch = 0 : i64, scratch_operands = 0 : i64, tpu.core_type = #tpu.core_type<tc>, window_params = [{transform_indices = @transform_0, window_bounds = array<i64: 8, 256>}, {pipeline_mode = #tpu.pipeline_mode<synchronous>, transform_indices = @transform_1, window_bounds = array<i64: 256, 32>}, {pipeline_mode = #tpu.pipeline_mode<synchronous>, transform_indices = @transform_2, window_bounds = array<i64: 32, 8>}, {pipeline_mode = #tpu.pipeline_mode<synchronous>, transform_indices = @transform_3, window_bounds = array<i64: 8, 2>}, {pipeline_mode = #tpu.pipeline_mode<synchronous>, transform_indices = @transform_4, window_bounds = array<i64: 3, 32>}, {transform_indices = @transform_5, window_bounds = array<i64: 8, 2>}]} {
    %c0 = arith.constant 0 : index
    %c0_0 = arith.constant 0 : index
    %0 = vector.load %arg1[%c0, %c0_0] : memref<8x256xf32, #tpu.memory_space<vmem>>, vector<8x256xf32>
    %1 = arith.truncf %0 : vector<8x256xf32> to vector<8x256xbf16>
    %c0_1 = arith.constant 0 : index
    %c0_2 = arith.constant 0 : index
    %2 = vector.load %arg2[%c0_1, %c0_2] : memref<256x32xbf16, #tpu.memory_space<vmem>>, vector<256x32xbf16>
    %cst = arith.constant dense<0.000000e+00> : vector<8x32xf32>
    %3 = tpu.matmul %1, %2, %cst {dimension_numbers = #tpu.dot_dimension_numbers<[1], [0], [0], [1], [0, 0, 1, 1], [], []>} : vector<8x256xbf16>, vector<256x32xbf16>, vector<8x32xf32> -> vector<8x32xf32>
    %c0_3 = arith.constant 0 : index
    %c0_4 = arith.constant 0 : index
    %4 = vector.load %arg5[%c0_3, %c0_4] : memref<3x32xf32, #tpu.memory_space<vmem>>, vector<1x32xf32>
    %5 = vector.broadcast %4 : vector<1x32xf32> to vector<8x32xf32>
    %6 = arith.addf %3, %5 : vector<8x32xf32>
    %cst_5 = arith.constant 0.000000e+00 : f32
    %7 = vector.broadcast %cst_5 : f32 to vector<8x32xf32>
    %8 = arith.maximumf %6, %7 : vector<8x32xf32>
    %9 = arith.truncf %8 : vector<8x32xf32> to vector<8x32xbf16>
    %c0_6 = arith.constant 0 : index
    %c0_7 = arith.constant 0 : index
    %10 = vector.load %arg3[%c0_6, %c0_7] : memref<32x8xbf16, #tpu.memory_space<vmem>>, vector<32x8xbf16>
    %cst_8 = arith.constant dense<0.000000e+00> : vector<8x8xf32>
    %11 = tpu.matmul %9, %10, %cst_8 {dimension_numbers = #tpu.dot_dimension_numbers<[1], [0], [0], [1], [0, 0, 1, 1], [], []>} : vector<8x32xbf16>, vector<32x8xbf16>, vector<8x8xf32> -> vector<8x8xf32>
    %c1 = arith.constant 1 : index
    %c0_9 = arith.constant 0 : index
    %12 = vector.load %arg5[%c1, %c0_9] : memref<3x32xf32, #tpu.memory_space<vmem>>, vector<1x8xf32>
    %13 = vector.broadcast %12 : vector<1x8xf32> to vector<8x8xf32>
    %14 = arith.addf %11, %13 : vector<8x8xf32>
    %cst_10 = arith.constant 0.000000e+00 : f32
    %15 = vector.broadcast %cst_10 : f32 to vector<8x8xf32>
    %16 = arith.maximumf %14, %15 : vector<8x8xf32>
    %17 = arith.truncf %16 : vector<8x8xf32> to vector<8x8xbf16>
    %c0_11 = arith.constant 0 : index
    %c0_12 = arith.constant 0 : index
    %18 = vector.load %arg4[%c0_11, %c0_12] : memref<8x2xbf16, #tpu.memory_space<vmem>>, vector<8x2xbf16>
    %cst_13 = arith.constant dense<0.000000e+00> : vector<8x2xf32>
    %19 = tpu.matmul %17, %18, %cst_13 {dimension_numbers = #tpu.dot_dimension_numbers<[1], [0], [0], [1], [0, 0, 1, 1], [], []>} : vector<8x8xbf16>, vector<8x2xbf16>, vector<8x2xf32> -> vector<8x2xf32>
    %c2 = arith.constant 2 : index
    %c0_14 = arith.constant 0 : index
    %20 = vector.load %arg5[%c2, %c0_14] : memref<3x32xf32, #tpu.memory_space<vmem>>, vector<1x2xf32>
    %21 = vector.broadcast %20 : vector<1x2xf32> to vector<8x2xf32>
    %22 = arith.addf %19, %21 : vector<8x2xf32>
    %c0_15 = arith.constant 0 : index
    %c0_16 = arith.constant 0 : index
    %23 = vector.load %arg6[%c0_15, %c0_16] : memref<8x2xf32, #tpu.memory_space<vmem>>, vector<8x2xf32>
    tpu.vector_store %arg6[%c0_15, %c0_16], %22 {strides = array<i32>} : memref<8x2xf32, #tpu.memory_space<vmem>>, vector<8x2xf32>,
    return
  }
  func.func @transform_0(%arg0: i32) -> (i32, i32) {
    %c0_i32 = arith.constant 0 : i32
    %c0_i32_0 = arith.constant 0 : i32
    return %arg0, %c0_i32 : i32, i32
  }
  func.func @transform_1(%arg0: i32) -> (i32, i32) {
    %c0_i32 = arith.constant 0 : i32
    %c0_i32_0 = arith.constant 0 : i32
    %c0_i32_1 = arith.constant 0 : i32
    return %c0_i32, %c0_i32_0 : i32, i32
  }
  func.func @transform_2(%arg0: i32) -> (i32, i32) {
    %c0_i32 = arith.constant 0 : i32
    %c0_i32_0 = arith.constant 0 : i32
    %c0_i32_1 = arith.constant 0 : i32
    return %c0_i32, %c0_i32_0 : i32, i32
  }
  func.func @transform_3(%arg0: i32) -> (i32, i32) {
    %c0_i32 = arith.constant 0 : i32
    %c0_i32_0 = arith.constant 0 : i32
    %c0_i32_1 = arith.constant 0 : i32
    return %c0_i32, %c0_i32_0 : i32, i32
  }
  func.func @transform_4(%arg0: i32) -> (i32, i32) {
    %c0_i32 = arith.constant 0 : i32
    %c0_i32_0 = arith.constant 0 : i32
    %c0_i32_1 = arith.constant 0 : i32
    return %c0_i32, %c0_i32_0 : i32, i32
  }
  func.func @transform_5(%arg0: i32) -> (i32, i32) {
    %c0_i32 = arith.constant 0 : i32
    %c0_i32_0 = arith.constant 0 : i32
    return %arg0, %c0_i32 : i32, i32
  }
}

</mosaic_0001>

<llo_original>
// kernel: net_forward.1
$region0: #{net_forward.1}
  #allocation0 [shape = 'u32[]', space=smem, size = 0x4, offset = 0x4, fixed_abs, tag = 'smem constant byte address 0x4 - core index']
  #allocation1 [shape = 'u32[144,128]{1,0:T(1,128)}', space=vmem, size = 0x12000, scoped, tag = 'internal scratch']
  %s0 = inlined_call_operand.vmem [shape: f32[8,256], index: 0, kind: input, shape index: {}]
  %s1 = inlined_call_operand.vmem [shape: bf16[256,32], index: 1, kind: input, shape index: {}]
  %s2 = inlined_call_operand.vmem [shape: bf16[32,8], index: 2, kind: input, shape index: {}]
  %s3 = inlined_call_operand.vmem [shape: bf16[8,2], index: 3, kind: input, shape index: {}]
  %s4 = inlined_call_operand.vmem [shape: f32[3,32], index: 4, kind: input, shape index: {}]
  %s5 = inlined_call_operand.vmem [shape: f32[8,2], index: 5, kind: output, shape index: {}]
  %s6 = sld [smem:[#allocation0]]
  $region30: #{net_forward.1} parent=0
    _
  %s8 = ssub.s32 1, %s6
  %s9 = scalar_select 0, %s8, %s6
  // Predicated region
  $region2: #{net_forward.1} parent=0 // pred_check
    _
  $region3: #{net_forward.1} parent=0 // pred_check_branch
    %11 = sbr.rel (0) target = $region5
  $region4: #{net_forward.1} parent=0 // pred_region
    _
  $region5: #{net_forward.1} parent=0 // pred_fallthru
    _
  // Predicated region
  $region6: #{net_forward.1} parent=0 // pred_check
    _
  $region7: #{net_forward.1} parent=0 // pred_check_branch
    %13 = sbr.rel (0) target = $region9
  $region8: #{net_forward.1} parent=0 // pred_region
    _
  $region9: #{net_forward.1} parent=0 // pred_fallthru
    _
  // Predicated region
  $region10: #{net_forward.1} parent=0 // pred_check
    _
  $region11: #{net_forward.1} parent=0 // pred_check_branch
    %15 = sbr.rel (0) target = $region13
  $region12: #{net_forward.1} parent=0 // pred_region
    _
  $region13: #{net_forward.1} parent=0 // pred_fallthru
    _
  // Predicated region
  $region14: #{net_forward.1} parent=0 // pred_check
    _
  $region15: #{net_forward.1} parent=0 // pred_check_branch
    %17 = sbr.rel (0) target = $region17
  $region16: #{net_forward.1} parent=0 // pred_region
    _
  $region17: #{net_forward.1} parent=0 // pred_fallthru
    _
  // Predicated region
  $region18: #{net_forward.1} parent=0 // pred_check
    _
  $region19: #{net_forward.1} parent=0 // pred_check_branch
    %19 = sbr.rel (0) target = $region21
  $region20: #{net_forward.1} parent=0 // pred_region
    _
  $region21: #{net_forward.1} parent=0 // pred_fallthru
    _
  %v21 = vld [vmem:[%s0] sm:$0xff]
  %v22 = vld [vmem:[%s0 + $0x8] sm:$0xff]
  %v23 = vpack.c.bf16 %v21, %v21
  %v24 = vpack.c.bf16 %v22, %v22
  %v25 = vld [vmem:[%s1] sm:$0xf]
  %v26 = vld [vmem:[%s1 + $0x4] sm:$0xf]
  %v27 = vld [vmem:[%s1 + $0x8] sm:$0xf]
  %v28 = vld [vmem:[%s1 + $0xc] sm:$0xf]
  %v29 = vld [vmem:[%s1 + $0x10] sm:$0xf]
  %v30 = vld [vmem:[%s1 + $0x14] sm:$0xf]
  %v31 = vld [vmem:[%s1 + $0x18] sm:$0xf]
  %v32 = vld [vmem:[%s1 + $0x1c] sm:$0xf]
  %v33 = vld [vmem:[%s1 + $0x20] sm:$0xf]
  %v34 = vld [vmem:[%s1 + $0x24] sm:$0xf]
  %v35 = vld [vmem:[%s1 + $0x28] sm:$0xf]
  %v36 = vld [vmem:[%s1 + $0x2c] sm:$0xf]
  %v37 = vld [vmem:[%s1 + $0x30] sm:$0xf]
  %v38 = vld [vmem:[%s1 + $0x34] sm:$0xf]
  %v39 = vld [vmem:[%s1 + $0x38] sm:$0xf]
  %v40 = vld [vmem:[%s1 + $0x3c] sm:$0xf]
  %v41 = vld [vmem:[%s1 + $0x40] sm:$0xf]
  %v42 = vld [vmem:[%s1 + $0x44] sm:$0xf]
  %v43 = vld [vmem:[%s1 + $0x48] sm:$0xf]
  %v44 = vld [vmem:[%s1 + $0x4c] sm:$0xf]
  %v45 = vld [vmem:[%s1 + $0x50] sm:$0xf]
  %v46 = vld [vmem:[%s1 + $0x54] sm:$0xf]
  %v47 = vld [vmem:[%s1 + $0x58] sm:$0xf]
  %v48 = vld [vmem:[%s1 + $0x5c] sm:$0xf]
  %v49 = vld [vmem:[%s1 + $0x60] sm:$0xf]
  %v50 = vld [vmem:[%s1 + $0x64] sm:$0xf]
  %v51 = vld [vmem:[%s1 + $0x68] sm:$0xf]
  %v52 = vld [vmem:[%s1 + $0x6c] sm:$0xf]
  %v53 = vld [vmem:[%s1 + $0x70] sm:$0xf]
  %v54 = vld [vmem:[%s1 + $0x74] sm:$0xf]
  %v55 = vld [vmem:[%s1 + $0x78] sm:$0xf]
  %v56 = vld [vmem:[%s1 + $0x7c] sm:$0xf]
  %v57 = vld [vmem:[%s4] sm:$0x1]
  %v58 = vlaneseq
  %v59 = vshrl.u32 %v58, 7
  %v60 = vsub.s32 0, %v59
  %v61 = vrot.slane %v57, %v60
  %v94 = vunpack.c.l.b16 %v25
  %v95 = vunpack.c.l.b16 %v26
  %v96 = vunpack.c.l.b16 %v27
  %v97 = vunpack.c.l.b16 %v28
  %v98 = vunpack.c.l.b16 %v29
  %v99 = vunpack.c.l.b16 %v30
  %v100 = vunpack.c.l.b16 %v31
  %v101 = vunpack.c.l.b16 %v32
  %v102 = vunpack.c.l.b16 %v33
  %v103 = vunpack.c.l.b16 %v34
  %v104 = vunpack.c.l.b16 %v35
  %v105 = vunpack.c.l.b16 %v36
  %v106 = vunpack.c.l.b16 %v37
  %v107 = vunpack.c.l.b16 %v38
  %v108 = vunpack.c.l.b16 %v39
  %v109 = vunpack.c.l.b16 %v40
  %v110 = vunpack.c.l.b16 %v41
  %v111 = vunpack.c.l.b16 %v42
  %v112 = vunpack.c.l.b16 %v43
  %v113 = vunpack.c.l.b16 %v44
  %v114 = vunpack.c.l.b16 %v45
  %v115 = vunpack.c.l.b16 %v46
  %v116 = vunpack.c.l.b16 %v47
  %v117 = vunpack.c.l.b16 %v48
  %v118 = vunpack.c.l.b16 %v49
  %v119 = vunpack.c.l.b16 %v50
  %v120 = vunpack.c.l.b16 %v51
  %v121 = vunpack.c.l.b16 %v52
  %v122 = vunpack.c.l.b16 %v53
  %v123 = vunpack.c.l.b16 %v54
  %v124 = vunpack.c.l.b16 %v55
  %v125 = vunpack.c.l.b16 %v56
  %v126 = vpack.c.b16 %v95, %v94
  %v127 = vpack.c.b16 %v97, %v96
  %v128 = vpack.c.b16 %v99, %v98
  %v129 = vpack.c.b16 %v101, %v100
  %v130 = vpack.c.b16 %v103, %v102
  %v131 = vpack.c.b16 %v105, %v104
  %v132 = vpack.c.b16 %v107, %v106
  %v133 = vpack.c.b16 %v109, %v108
  %v134 = vpack.c.b16 %v111, %v110
  %v135 = vpack.c.b16 %v113, %v112
  %v136 = vpack.c.b16 %v115, %v114
  %v137 = vpack.c.b16 %v117, %v116
  %v138 = vpack.c.b16 %v119, %v118
  %v139 = vpack.c.b16 %v121, %v120
  %v140 = vpack.c.b16 %v123, %v122
  %v141 = vpack.c.b16 %v125, %v124
  %158 = vmatprep.subr.bf16.mxu0 0
  %159 = vmatpush1.bf16.msra.mxu0 %v133
  %160 = vmatprep.subr.bf16.mxu0 0
  %161 = vmatpush1.bf16.msra.mxu0 %v132
  %162 = vmatprep.subr.bf16.mxu0 0
  %163 = vmatpush1.bf16.msra.mxu0 %v131
  %164 = vmatprep.subr.bf16.mxu0 0
  %165 = vmatpush1.bf16.msra.mxu0 %v130
  %166 = vmatprep.subr.bf16.mxu0 0
  %167 = vmatpush1.bf16.msra.mxu0 %v129
  %168 = vmatprep.subr.bf16.mxu0 0
  %169 = vmatpush1.bf16.msra.mxu0 %v128
  %170 = vmatprep.subr.bf16.mxu0 0
  %171 = vmatpush1.bf16.msra.mxu0 %v127
  %172 = vmatprep.subr.bf16.mxu0 0
  %173 = vmatpush1.bf16.msra.mxu0 %v126
  %174 = vmatprep.subr.bf16.mxu0 0
  %175 = vmatpush2.bf16.msra.mxu0 %v141
  %176 = vmatprep.subr.bf16.mxu0 0
  %177 = vmatpush2.bf16.msra.mxu0 %v140
  %178 = vmatprep.subr.bf16.mxu0 0
  %179 = vmatpush2.bf16.msra.mxu0 %v139
  %180 = vmatprep.subr.bf16.mxu0 0
  %181 = vmatpush2.bf16.msra.mxu0 %v138
  %182 = vmatprep.subr.bf16.mxu0 0
  %183 = vmatpush2.bf16.msra.mxu0 %v137
  %184 = vmatprep.subr.bf16.mxu0 0
  %185 = vmatpush2.bf16.msra.mxu0 %v136
  %186 = vmatprep.subr.bf16.mxu0 0
  %187 = vmatpush2.bf16.msra.mxu0 %v135
  %188 = vmatprep.subr.bf16.mxu0 0
  %189 = vmatpush2.bf16.msra.mxu0 %v134
  %190 = vmatprep.mubr.bf16.mxu0 %v24
  %191 = vmatmul.mubr.bf16.gmra.mxu0 %v23
  %v192 = vpop.f32.mrf.mxu0
  %v193 = vadd.f32 %v61, %v192
  %v194 = vpop.f32.mrf.mxu0
  %v195 = vpop.f32.mrf.mxu0
  %v196 = vpop.f32.mrf.mxu0
  %197 = vdwg.mxu0
  %v198 = vmax.f32 %v193, 0.0
  %v199 = vpack.c.bf16 %v198, %v198
  %v200 = vld [vmem:[%s2] sm:$0xf]
  %v201 = vld [vmem:[%s2 + $0x4] sm:$0xf]
  %v202 = vld [vmem:[%s2 + $0x8] sm:$0xf]
  %v203 = vld [vmem:[%s2 + $0xc] sm:$0xf]
  %v204 = vld [vmem:[%s4 + $0x1] sm:$0x1]
  %v205 = vlaneseq
  %v206 = vshrl.u32 %v205, 7
  %v207 = vsub.s32 0, %v206
  %v208 = vrot.slane %v204, %v207
  %v213 = vunpack.c.l.b16 %v200
  %v214 = vunpack.c.l.b16 %v201
  %v215 = vunpack.c.l.b16 %v202
  %v216 = vunpack.c.l.b16 %v203
  %v217 = vpack.c.b16 %v214, %v213
  %v218 = vpack.c.b16 %v216, %v215
  %vm221 = vcmask 261120
  %v223 = vsel %vm221, %v199, 0
  %225 = vmatprep.subr.bf16.mxu0 0
  %226 = vmatpush1.bf16.msra.mxu0 0
  %227 = vmatprep.subr.bf16.mxu0 0
  %228 = vmatpush1.bf16.msra.mxu0 0
  %229 = vmatprep.subr.bf16.mxu0 0
  %230 = vmatpush1.bf16.msra.mxu0 0
  %231 = vmatprep.subr.bf16.mxu0 0
  %232 = vmatpush1.bf16.msra.mxu0 0
  %233 = vmatprep.subr.bf16.mxu0 0
  %234 = vmatpush1.bf16.msra.mxu0 0
  %235 = vmatprep.subr.bf16.mxu0 0
  %236 = vmatpush1.bf16.msra.mxu0 0
  %237 = vmatprep.subr.bf16.mxu0 0
  %238 = vmatpush1.bf16.msra.mxu0 %v218
  %239 = vmatprep.subr.bf16.mxu0 0
  %240 = vmatpush1.bf16.msra.mxu0 %v217
  %241 = vmatprep.subr.bf16.mxu0 0
  %242 = vmatpush2.bf16.msra.mxu0 0
  %243 = vmatprep.subr.bf16.mxu0 0
  %244 = vmatpush2.bf16.msra.mxu0 0
  %245 = vmatprep.subr.bf16.mxu0 0
  %246 = vmatpush2.bf16.msra.mxu0 0
  %247 = vmatprep.subr.bf16.mxu0 0
  %248 = vmatpush2.bf16.msra.mxu0 0
  %249 = vmatprep.subr.bf16.mxu0 0
  %250 = vmatpush2.bf16.msra.mxu0 0
  %251 = vmatprep.subr.bf16.mxu0 0
  %252 = vmatpush2.bf16.msra.mxu0 0
  %253 = vmatprep.subr.bf16.mxu0 0
  %254 = vmatpush2.bf16.msra.mxu0 0
  %255 = vmatprep.subr.bf16.mxu0 0
  %256 = vmatpush2.bf16.msra.mxu0 0
  %257 = vmatprep.mubr.bf16.mxu0 0
  %258 = vmatmul.mubr.bf16.gmra.mxu0 %v223
  %v259 = vpop.f32.mrf.mxu0
  %v260 = vadd.f32 %v208, %v259
  %v261 = vpop.f32.mrf.mxu0
  %v262 = vpop.f32.mrf.mxu0
  %v263 = vpop.f32.mrf.mxu0
  %264 = vdwg.mxu0
  %v265 = vmax.f32 %v260, 0.0
  %v266 = vpack.c.bf16 %v265, %v265
  %v267 = vld [vmem:[%s3] sm:$0xf]
  %v268 = vld [vmem:[%s4 + $0x2] sm:$0x1]
  %v269 = vlaneseq
  %v270 = vshrl.u32 %v269, 7
  %v271 = vsub.s32 0, %v270
  %v272 = vrot.slane %v268, %v271
  %vm273 = vcmask 64512
  %v275 = vsel %vm273, %v266, 0
  %vm277 = vcmask 1043456
  %v279 = vsel %vm277, %v267, 0
  %281 = vmatprep.subr.bf16.mxu0 0
  %282 = vmatpush1.bf16.msra.mxu0 0
  %283 = vmatprep.subr.bf16.mxu0 0
  %284 = vmatpush1.bf16.msra.mxu0 0
  %285 = vmatprep.subr.bf16.mxu0 0
  %286 = vmatpush1.bf16.msra.mxu0 0
  %287 = vmatprep.subr.bf16.mxu0 0
  %288 = vmatpush1.bf16.msra.mxu0 0
  %289 = vmatprep.subr.bf16.mxu0 0
  %290 = vmatpush1.bf16.msra.mxu0 0
  %291 = vmatprep.subr.bf16.mxu0 0
  %292 = vmatpush1.bf16.msra.mxu0 0
  %293 = vmatprep.subr.bf16.mxu0 0
  %294 = vmatpush1.bf16.msra.mxu0 0
  %295 = vmatprep.subr.bf16.mxu0 0
  %296 = vmatpush1.bf16.msra.mxu0 %v279
  %297 = vmatprep.subr.bf16.mxu0 0
  %298 = vmatpush2.bf16.msra.mxu0 0
  %299 = vmatprep.subr.bf16.mxu0 0
  %300 = vmatpush2.bf16.msra.mxu0 0
  %301 = vmatprep.subr.bf16.mxu0 0
  %302 = vmatpush2.bf16.msra.mxu0 0
  %303 = vmatprep.subr.bf16.mxu0 0
  %304 = vmatpush2.bf16.msra.mxu0 0
  %305 = vmatprep.subr.bf16.mxu0 0
  %306 = vmatpush2.bf16.msra.mxu0 0
  %307 = vmatprep.subr.bf16.mxu0 0
  %308 = vmatpush2.bf16.msra.mxu0 0
  %309 = vmatprep.subr.bf16.mxu0 0
  %310 = vmatpush2.bf16.msra.mxu0 0
  %311 = vmatprep.subr.bf16.mxu0 0
  %312 = vmatpush2.bf16.msra.mxu0 0
  %313 = vmatprep.mubr.bf16.mxu0 0
  %314 = vmatmul.mubr.bf16.gmra.mxu0 %v275
  %v315 = vpop.f32.mrf.mxu0
  %v316 = vadd.f32 %v272, %v315
  %v317 = vpop.f32.mrf.mxu0
  %v318 = vpop.f32.mrf.mxu0
  %v319 = vpop.f32.mrf.mxu0
  %320 = vdwg.mxu0
  %vm321 = vcmask 15360
  %322 = vst.msk [vmem:[%s5] sm:$0xff] %vm321, %v316
  // Predicated region
  $region22: #{net_forward.1} parent=0 // pred_check
    _
  $region23: #{net_forward.1} parent=0 // pred_check_branch
    %324 = sbr.rel (0) target = $region25
  $region24: #{net_forward.1} parent=0 // pred_region
    _
  $region25: #{net_forward.1} parent=0 // pred_fallthru
    _
  // Predicated region
  $region26: #{net_forward.1} parent=0 // pred_check
    _
  $region27: #{net_forward.1} parent=0 // pred_check_branch
    %326 = sbr.rel (0) target = $region29
  $region28: #{net_forward.1} parent=0 // pred_region
    _
  $region29: #{net_forward.1} parent=0 // pred_fallthru
    _

</llo_original>
